<compile_context>
chip_gen: v7x
topology: tpu7x:2x2x1
jax: 0.10.0
libtpu: 0.0.40
codegen_flags: <defaults>
</compile_context>

<pallas_src>
import jax
import jax.numpy as jnp
from jax.experimental import pallas as pl
from jax.experimental.pallas import tpu as pltpu


def _round_up(n, m):
    return ((n + m - 1) // m) * m


def _vmem_limit_bytes():
    """~75% of physical per-core VMEM; leaves headroom for Mosaic scratch."""
    try:
        cap = int(pltpu.get_tpu_info().vmem_capacity_bytes)
    except Exception:
        cap = 64 * 1024 * 1024  # conservative fallback (v7x physical size)
    return min(max(cap * 3 // 4, 32 * 1024 * 1024), 112 * 1024 * 1024)


def projection_head(x, w1, b1, w2, b2, gamma, beta, *, block_b=1024,
                    out_dtype=None):
    """x: [B, E]; w1: [E, P]; w2: [P, P]; b1/b2/gamma/beta: [P] or [1, P].

    Weights are stored [in_features, out_features] (torch weight.T), so the
    kernel computes y = x @ W + b.  Matmul operands are cast to bf16 with f32
    accumulation; bias / GELU / residual / LayerNorm stay in f32.
    Returns [B, P] in `out_dtype` (default: x.dtype).
    """
    B, E = x.shape
    P = w1.shape[1]
    out_dtype = x.dtype if out_dtype is None else out_dtype

    # --- lane-dense padding (exact: zero pad of contraction / output columns).
    E_pad = _round_up(E, 128)
    P_pad = _round_up(P, 128)
    if E_pad != E:
        x = jnp.pad(x, ((0, 0), (0, E_pad - E)))
        w1 = jnp.pad(w1, ((0, E_pad - E), (0, 0)))
    if P_pad != P:
        w1 = jnp.pad(w1, ((0, 0), (0, P_pad - P)))
        w2 = jnp.pad(w2, ((0, P_pad - P), (0, P_pad - P)))

    # --- bf16 MXU operands; biases / LN params packed into one (4, P_pad) f32.
    x = x.astype(jnp.bfloat16)
    w1 = w1.astype(jnp.bfloat16)
    w2 = w2.astype(jnp.bfloat16)
    params = jnp.stack([
        b1.reshape(-1).astype(jnp.float32),
        b2.reshape(-1).astype(jnp.float32),
        gamma.reshape(-1).astype(jnp.float32),
        beta.reshape(-1).astype(jnp.float32),
    ], axis=0)                                            # (4, P)
    if P_pad != P:
        params = jnp.pad(params, ((0, 0), (0, P_pad - P)))

    # --- batch tiling: 16-row aligned (bf16 sublane packing), and split into
    # >= 2 grid steps when possible so megacore ("parallel") can use both TCs.
    B_pad = _round_up(B, 16)
    tile_b = min(block_b, B_pad)
    if B_pad // tile_b < 2 and B_pad > 16:
        tile_b = _round_up(pl.cdiv(B_pad, 2), 16)
    B_pad = _round_up(B_pad, tile_b)
    if B_pad != x.shape[0]:
        x = jnp.pad(x, ((0, B_pad - x.shape[0]), (0, 0)))
    grid = (B_pad // tile_b,)

    inv_p = 1.0 / float(P)  # true P: padded columns of h are exactly zero.

    def kernel(x_ref, w1_ref, w2_ref, params_ref, o_ref):
        # projection: Linear(E -> P). bf16 operands -> MXU, f32 accumulation.
        projected = jnp.dot(x_ref[...], w1_ref[...],
                            preferred_element_type=jnp.float32)
        projected = projected + params_ref[0:1, :]            # b1 (1, P) bcast

        # tanh-approx GELU (EUP tanh; torch exact-erf deviates ~1e-3).
        c0 = 0.7978845608028654   # sqrt(2/pi)
        g = 0.5 * projected * (
            1.0 + jnp.tanh(c0 * (projected
                                 + 0.044715 * projected * projected * projected)))

        # fc: Linear(P -> P). Cast activations back to bf16 for the MXU.
        h = jnp.dot(g.astype(w2_ref.dtype), w2_ref[...],
                    preferred_element_type=jnp.float32)
        h = h + params_ref[1:2, :]                             # b2

        # TODO(synk): nn.Dropout is identity here (inference / eval mode).

        # residual
        h = h + projected

        # LayerNorm over last dim, eps = 1e-5, single-pass sum / sum-of-squares.
        s = jnp.sum(h, axis=-1, keepdims=True)
        ss = jnp.sum(h * h, axis=-1, keepdims=True)
        mean = s * inv_p
        var = jnp.maximum(ss * inv_p - mean * mean, 0.0)       # clamp cancellation
        inv_std = jax.lax.rsqrt(var + 1e-5)
        out = (h - mean) * inv_std * params_ref[2:3, :] + params_ref[3:4, :]

        o_ref[...] = out.astype(o_ref.dtype)

    # Advisory cost estimate so XLA schedules this call well inside larger jits.
    flops = 2 * B_pad * (E_pad * P_pad + P_pad * P_pad) + 14 * B_pad * P_pad
    bytes_accessed = (
        x.size * 2 + w1.size * 2 + w2.size * 2 + params.size * 4
        + B_pad * P_pad * jnp.dtype(out_dtype).itemsize)
    cost = pl.CostEstimate(flops=flops,
                           transcendentals=B_pad * P_pad,
                           bytes_accessed=bytes_accessed)

    out = pl.pallas_call(
        kernel,
        out_shape=jax.ShapeDtypeStruct((B_pad, P_pad), out_dtype),
        grid=grid,
        in_specs=[
            pl.BlockSpec((tile_b, E_pad), lambda i: (i, 0)),    # x: batch-tiled
            pl.BlockSpec((E_pad, P_pad), lambda i: (0, 0)),     # W1: resident
            pl.BlockSpec((P_pad, P_pad), lambda i: (0, 0)),     # W2: resident
            pl.BlockSpec((4, P_pad), lambda i: (0, 0)),         # b1/b2/gamma/beta
        ],
        out_specs=pl.BlockSpec((tile_b, P_pad), lambda i: (i, 0)),
        compiler_params=pltpu.CompilerParams(
            dimension_semantics=("parallel",),       # megacore-shard batch tiles
            vmem_limit_bytes=_vmem_limit_bytes()),
        cost_estimate=cost,
    )(x, w1, w2, params)

    if B_pad != B or P_pad != P:
        out = out[:B, :P]
    return out


def _reference_mirror(x, w1, b1, w2, b2, gamma, beta):
    """Mirrors the kernel's arithmetic (bf16 MXU feed, tanh GELU) in plain JAX,
    so this comparison isolates kernel-implementation error."""
    xb = x.astype(jnp.bfloat16).astype(jnp.float32)
    w1b = w1.astype(jnp.bfloat16).astype(jnp.float32)
    w2b = w2.astype(jnp.bfloat16).astype(jnp.float32)
    projected = xb @ w1b + b1
    c0 = 0.7978845608028654
    g = 0.5 * projected * (1.0 + jnp.tanh(c0 * (projected + 0.044715 * projected ** 3)))
    h = g.astype(jnp.bfloat16).astype(jnp.float32) @ w2b + b2
    h = h + projected
    mean = jnp.mean(h, axis=-1, keepdims=True)
    var = jnp.mean((h - mean) ** 2, axis=-1, keepdims=True)
    return (h - mean) * jax.lax.rsqrt(var + 1e-5) * gamma + beta


def _reference_torch(x, w1, b1, w2, b2, gamma, beta):
    """torch-semantics reference: f32 matmuls, exact erf GELU (nn.GELU default)."""
    projected = x @ w1 + b1
    g = 0.5 * projected * (1.0 + jax.lax.erf(projected / jnp.sqrt(2.0)))
    h = g @ w2 + b2 + projected
    mean = jnp.mean(h, axis=-1, keepdims=True)
    var = jnp.mean((h - mean) ** 2, axis=-1, keepdims=True)
    return (h - mean) * jax.lax.rsqrt(var + 1e-5) * gamma + beta


if __name__ == "__main__":
    # batch=48, embedding_dim=32, projection_dim=128 (small demo shapes).
    # B=48 exercises the 16-aligned batch padding and a 2-step "parallel" grid;
    # E=32 exercises the lane-dense zero-pad of the contraction dim.
    B, E, P = 48, 32, 128

    key = jax.random.PRNGKey(0)
    kx, kw1, kb1, kw2, kb2 = jax.random.split(key, 5)

    x = jax.random.normal(kx, (B, E), dtype=jnp.float32)

    # deterministic synthetic parameters (nn.Linear-like scaling)
    w1 = jax.random.normal(kw1, (E, P), dtype=jnp.float32) * (1.0 / jnp.sqrt(E))
    b1 = jax.random.normal(kb1, (1, P), dtype=jnp.float32) * 0.01
    w2 = jax.random.normal(kw2, (P, P), dtype=jnp.float32) * (1.0 / jnp.sqrt(P))
    b2 = jax.random.normal(kb2, (1, P), dtype=jnp.float32) * 0.01
    gamma = jnp.ones((1, P), dtype=jnp.float32)
    beta = jnp.zeros((1, P), dtype=jnp.float32)

    out = projection_head(x, w1, b1, w2, b2, gamma, beta)
    out = jax.block_until_ready(out)
    assert out.shape == (B, P)

    # Kernel-fidelity check (same bf16 feed + tanh GELU as the kernel).
    ref_mirror = _reference_mirror(x, w1, b1, w2, b2, gamma, beta)
    err_mirror = float(jnp.max(jnp.abs(out - ref_mirror)))
    assert jnp.allclose(out, ref_mirror, atol=2e-3, rtol=2e-3), err_mirror

    # torch-semantics check (exact erf GELU, f32); looser tolerance covers the
    # bf16 MXU rounding and the ~1e-3 tanh-GELU approximation.
    ref_torch = _reference_torch(x, w1, b1, w2, b2, gamma, beta)
    err_torch = float(jnp.max(jnp.abs(out - ref_torch)))
    assert jnp.allclose(out, ref_torch, atol=3e-2, rtol=3e-2), err_torch

    print("KERNEL_OK")
</pallas_src>

<mosaic_0001>
module attributes {stable_mosaic.version = 11 : i64} {
  func.func @kernel(%arg0: i32, %arg1: memref<32x128xbf16, #tpu.memory_space<vmem>>, %arg2: memref<128x128xbf16, #tpu.memory_space<vmem>>, %arg3: memref<128x128xbf16, #tpu.memory_space<vmem>>, %arg4: memref<4x128xf32, #tpu.memory_space<vmem>>, %arg5: memref<32x128xf32, #tpu.memory_space<vmem>>) attributes {dimension_semantics = [#tpu.dimension_semantics<parallel>], iteration_bounds = array<i64: 2>, scalar_prefetch = 0 : i64, scratch_operands = 0 : i64, tpu.core_type = #tpu.core_type<tc>, window_params = [{transform_indices = @transform_0, window_bounds = array<i64: 32, 128>}, {pipeline_mode = #tpu.pipeline_mode<synchronous>, transform_indices = @transform_1, window_bounds = array<i64: 128, 128>}, {pipeline_mode = #tpu.pipeline_mode<synchronous>, transform_indices = @transform_2, window_bounds = array<i64: 128, 128>}, {pipeline_mode = #tpu.pipeline_mode<synchronous>, transform_indices = @transform_3, window_bounds = array<i64: 4, 128>}, {transform_indices = @transform_4, window_bounds = array<i64: 32, 128>}]} {
    %c0 = arith.constant 0 : index
    %c0_0 = arith.constant 0 : index
    %0 = vector.load %arg1[%c0, %c0_0] : memref<32x128xbf16, #tpu.memory_space<vmem>>, vector<32x128xbf16>
    %c0_1 = arith.constant 0 : index
    %c0_2 = arith.constant 0 : index
    %1 = vector.load %arg2[%c0_1, %c0_2] : memref<128x128xbf16, #tpu.memory_space<vmem>>, vector<128x128xbf16>
    %cst = arith.constant dense<0.000000e+00> : vector<32x128xf32>
    %2 = tpu.matmul %0, %1, %cst {dimension_numbers = #tpu.dot_dimension_numbers<[1], [0], [0], [1], [0, 0, 1, 1], [], []>} : vector<32x128xbf16>, vector<128x128xbf16>, vector<32x128xf32> -> vector<32x128xf32>
    %c0_3 = arith.constant 0 : index
    %c0_4 = arith.constant 0 : index
    %3 = vector.load %arg4[%c0_3, %c0_4] : memref<4x128xf32, #tpu.memory_space<vmem>>, vector<1x128xf32>
    %4 = vector.broadcast %3 : vector<1x128xf32> to vector<32x128xf32>
    %5 = arith.addf %2, %4 : vector<32x128xf32>
    %cst_5 = arith.constant 5.000000e-01 : f32
    %6 = vector.broadcast %cst_5 : f32 to vector<32x128xf32>
    %7 = arith.mulf %6, %5 : vector<32x128xf32>
    %cst_6 = arith.constant 4.471500e-02 : f32
    %8 = vector.broadcast %cst_6 : f32 to vector<32x128xf32>
    %9 = arith.mulf %8, %5 : vector<32x128xf32>
    %10 = arith.mulf %9, %5 : vector<32x128xf32>
    %11 = arith.mulf %10, %5 : vector<32x128xf32>
    %12 = arith.addf %5, %11 : vector<32x128xf32>
    %cst_7 = arith.constant 0.797884583 : f32
    %13 = vector.broadcast %cst_7 : f32 to vector<32x128xf32>
    %14 = arith.mulf %13, %12 : vector<32x128xf32>
    %15 = math.tanh %14 : vector<32x128xf32>
    %cst_8 = arith.constant 1.000000e+00 : f32
    %16 = vector.broadcast %cst_8 : f32 to vector<32x128xf32>
    %17 = arith.addf %16, %15 : vector<32x128xf32>
    %18 = arith.mulf %7, %17 : vector<32x128xf32>
    %19 = arith.truncf %18 : vector<32x128xf32> to vector<32x128xbf16>
    %c0_9 = arith.constant 0 : index
    %c0_10 = arith.constant 0 : index
    %20 = vector.load %arg3[%c0_9, %c0_10] : memref<128x128xbf16, #tpu.memory_space<vmem>>, vector<128x128xbf16>
    %cst_11 = arith.constant dense<0.000000e+00> : vector<32x128xf32>
    %21 = tpu.matmul %19, %20, %cst_11 {dimension_numbers = #tpu.dot_dimension_numbers<[1], [0], [0], [1], [0, 0, 1, 1], [], []>} : vector<32x128xbf16>, vector<128x128xbf16>, vector<32x128xf32> -> vector<32x128xf32>
    %c1 = arith.constant 1 : index
    %c0_12 = arith.constant 0 : index
    %22 = vector.load %arg4[%c1, %c0_12] : memref<4x128xf32, #tpu.memory_space<vmem>>, vector<1x128xf32>
    %23 = vector.broadcast %22 : vector<1x128xf32> to vector<32x128xf32>
    %24 = arith.addf %21, %23 : vector<32x128xf32>
    %25 = arith.addf %24, %5 : vector<32x128xf32>
    %cst_13 = arith.constant dense<0.000000e+00> : vector<32xf32>
    %26 = vector.multi_reduction <add>, %25, %cst_13 [1] : vector<32x128xf32> to vector<32xf32>
    %27 = vector.shape_cast %26 : vector<32xf32> to vector<32x1xf32>
    %28 = arith.mulf %25, %25 : vector<32x128xf32>
    %cst_14 = arith.constant dense<0.000000e+00> : vector<32xf32>
    %29 = vector.multi_reduction <add>, %28, %cst_14 [1] : vector<32x128xf32> to vector<32xf32>
    %30 = vector.shape_cast %29 : vector<32xf32> to vector<32x1xf32>
    %cst_15 = arith.constant 7.812500e-03 : f32
    %31 = vector.broadcast %cst_15 : f32 to vector<32x1xf32>
    %32 = arith.mulf %27, %31 : vector<32x1xf32>
    %cst_16 = arith.constant 7.812500e-03 : f32
    %33 = vector.broadcast %cst_16 : f32 to vector<32x1xf32>
    %34 = arith.mulf %30, %33 : vector<32x1xf32>
    %35 = arith.mulf %32, %32 : vector<32x1xf32>
    %36 = arith.subf %34, %35 : vector<32x1xf32>
    %cst_17 = arith.constant 0.000000e+00 : f32
    %37 = vector.broadcast %cst_17 : f32 to vector<32x1xf32>
    %38 = arith.maximumf %36, %37 : vector<32x1xf32>
    %cst_18 = arith.constant 9.99999974E-6 : f32
    %39 = vector.broadcast %cst_18 : f32 to vector<32x1xf32>
    %40 = arith.addf %38, %39 : vector<32x1xf32>
    %41 = math.rsqrt %40 : vector<32x1xf32>
    %42 = vector.broadcast %32 : vector<32x1xf32> to vector<32x128xf32>
    %43 = arith.subf %25, %42 : vector<32x128xf32>
    %44 = vector.broadcast %41 : vector<32x1xf32> to vector<32x128xf32>
    %45 = arith.mulf %43, %44 : vector<32x128xf32>
    %c2 = arith.constant 2 : index
    %c0_19 = arith.constant 0 : index
    %46 = vector.load %arg4[%c2, %c0_19] : memref<4x128xf32, #tpu.memory_space<vmem>>, vector<1x128xf32>
    %47 = vector.broadcast %46 : vector<1x128xf32> to vector<32x128xf32>
    %48 = arith.mulf %45, %47 : vector<32x128xf32>
    %c3 = arith.constant 3 : index
    %c0_20 = arith.constant 0 : index
    %49 = vector.load %arg4[%c3, %c0_20] : memref<4x128xf32, #tpu.memory_space<vmem>>, vector<1x128xf32>
    %50 = vector.broadcast %49 : vector<1x128xf32> to vector<32x128xf32>
    %51 = arith.addf %48, %50 : vector<32x128xf32>
    %c0_21 = arith.constant 0 : index
    %c0_22 = arith.constant 0 : index
    %52 = vector.load %arg5[%c0_21, %c0_22] : memref<32x128xf32, #tpu.memory_space<vmem>>, vector<32x128xf32>
    tpu.vector_store %arg5[%c0_21, %c0_22], %51 {strides = array<i32>} : memref<32x128xf32, #tpu.memory_space<vmem>>, vector<32x128xf32>,
    return
  }
  func.func @transform_0(%arg0: i32) -> (i32, i32) {
    %c0_i32 = arith.constant 0 : i32
    %c0_i32_0 = arith.constant 0 : i32
    return %arg0, %c0_i32 : i32, i32
  }
  func.func @transform_1(%arg0: i32) -> (i32, i32) {
    %c0_i32 = arith.constant 0 : i32
    %c0_i32_0 = arith.constant 0 : i32
    %c0_i32_1 = arith.constant 0 : i32
    return %c0_i32, %c0_i32_0 : i32, i32
  }
  func.func @transform_2(%arg0: i32) -> (i32, i32) {
    %c0_i32 = arith.constant 0 : i32
    %c0_i32_0 = arith.constant 0 : i32
    %c0_i32_1 = arith.constant 0 : i32
    return %c0_i32, %c0_i32_0 : i32, i32
  }
  func.func @transform_3(%arg0: i32) -> (i32, i32) {
    %c0_i32 = arith.constant 0 : i32
    %c0_i32_0 = arith.constant 0 : i32
    %c0_i32_1 = arith.constant 0 : i32
    return %c0_i32, %c0_i32_0 : i32, i32
  }
  func.func @transform_4(%arg0: i32) -> (i32, i32) {
    %c0_i32 = arith.constant 0 : i32
    %c0_i32_0 = arith.constant 0 : i32
    return %arg0, %c0_i32 : i32, i32
  }
}

</mosaic_0001>

<llo_original>
// kernel: tpu_custom_call.1
$region0: #{tpu_custom_call.1}
  #allocation0 [shape = 'u32[]', space=smem, size = 0x4, offset = 0x4, fixed_abs, tag = 'smem constant byte address 0x4 - core index']
  #allocation1 [shape = 'u32[144,128]{1,0:T(1,128)}', space=vmem, size = 0x12000, scoped, tag = 'internal scratch']
  %s0 = inlined_call_operand.hbm [shape: bf16[64,128], index: 0, kind: input, shape index: {}]
  %s1 = inlined_call_operand.hbm [shape: bf16[128,128], index: 1, kind: input, shape index: {}]
  %s2 = inlined_call_operand.hbm [shape: bf16[128,128], index: 2, kind: input, shape index: {}]
  %s3 = inlined_call_operand.vmem [shape: f32[4,128], index: 3, kind: input, shape index: {}]
  %s4 = inlined_call_operand.hbm [shape: f32[64,128], index: 4, kind: output, shape index: {}]
  %s5 = sld [smem:[#allocation0]]
  $region61: #{tpu_custom_call.1} parent=0
    _
  %s7 = ssub.s32 1, %s5
  %s8 = scalar_select 0, %s7, %s5
  $region1: #{tpu_custom_call.1} parent=0
    #allocation2 [shape = 'u8[16384]{0}', space=vmem, size = 0x4000, scoped, tag = 'input window, operand 0']
    #allocation3 [shape = 's32[2]{0}', space=sflag, size = 0x8, scoped, tag = 'scoped memory for tpu_custom_call.1']
    #allocation4 [shape = 's32[2]{0}', space=sflag, size = 0x8, scoped, tag = 'scoped memory for tpu_custom_call.1']
    #allocation5 [shape = 'u8[32768]{0}', space=vmem, size = 0x8000, scoped, tag = 'input window, operand 1, single buffered']
    #allocation6 [shape = 's32[1]{0}', space=sflag, size = 0x4, scoped, tag = 'scoped memory for tpu_custom_call.1']
    #allocation7 [shape = 'u8[32768]{0}', space=vmem, size = 0x8000, scoped, tag = 'input window, operand 2, single buffered']
    #allocation8 [shape = 'u8[32768]{0}', space=vmem, size = 0x8000, scoped, tag = 'output window, operand 0']
    %9 = vsyncpa [#allocation3], 0
    %s10 = scalar_lea.sflag [#allocation3], 1
    %11 = vsyncpa %s10, 0
    %12 = vsyncpa [#allocation6], 0
    %13 = vsyncpa [#allocation4], 0
    %s14 = scalar_lea.sflag [#allocation4], 1
    %15 = vsyncpa %s14, 0
    loop: start=0, step=1, limit=4
    $region2: #{tpu_custom_call.1} parent=1 // loop_pre_header
      _
    $region3: #{tpu_custom_call.1} parent=1 // loop_header
      %s17 = sphi 0, %s21
      %p18 = scmp.ge.s32.totalorder %s17, 4
      %s27 = sphi 0, %s29
      %s30 = sphi 0, %s27
      %s31 = sphi 0, %s30
      %s47 = sphi 0, %s31
      %s51 = sphi 0, %s51
      %s53 = sphi 0, %s51
      %s54 = sphi 0, %s53
      %s68 = sphi 0, %s54
      %s72 = sphi 0, %s72
      %s74 = sphi 0, %s72
      %s75 = sphi 0, %s74
      %s89 = sphi 0, %s75
      %s93 = sphi 0, %s93
      %s95 = sphi 0, %s93
      %s96 = sphi 0, %s95
      %s110 = sphi 0, %s96
      %s116 = sphi 0, %s118
      %s119 = sphi 0, %s116
      %s120 = sphi 0, %s119
      %s136 = sphi 0, %s120
    $region4: #{tpu_custom_call.1} parent=1 // loop_header_branch
      %20 = sbr.rel (%p18) target = $region8
    $region5: #{tpu_custom_call.1} parent=1 // loop_body
      %s22 = ssub.s32 %s17, 1
      %s23 = ssub.s32 %s17, 2
      %s24 = sadd.s32 %s17, 1
      %s25 = ssub.s32 %s17, %s24
      %p26 = scmp.eq.s32.totalorder %s25, 0
      %s28 = sadd.s32 %s27, 1
      %s29 = scalar_select %p26, %s27, %s28
      %p32 = pneg %p26
      %p33 = scmp.eq.s32.totalorder %s17, 1
      %p34 = por %p32, %p33
      %p35 = scmp.ne.s32.totalorder %s27, %s30
      %p36 = scmp.eq.s32.totalorder %s17, 0
      %p37 = por %p35, %p36
      %p38 = scmp.ne.s32.totalorder %s27, %s30
      %p39 = scmp.eq.s32.totalorder %s22, 1
      %p40 = por %p38, %p39
      %p41 = scmp.ne.s32.totalorder %s30, %s31
      %p42 = scmp.eq.s32.totalorder %s22, 0
      %p43 = por %p41, %p42
      %p44 = scmp.ne.s32.totalorder %s30, %s31
      %p45 = scmp.eq.s32.totalorder %s23, 1
      %p46 = por %p44, %p45
      %p48 = scmp.ne.s32.totalorder %s31, %s47
      %p49 = scmp.eq.s32.totalorder %s23, 0
      %p50 = por %p48, %p49
      %s52 = sadd.s32 %s51, 1
      %p55 = scmp.eq.s32.totalorder %s17, 1
      %p56 = scmp.ne.s32.totalorder %s51, %s53
      %p57 = scmp.eq.s32.totalorder %s17, 0
      %p58 = por %p56, %p57
      %p59 = scmp.ne.s32.totalorder %s51, %s53
      %p60 = scmp.eq.s32.totalorder %s22, 1
      %p61 = por %p59, %p60
      %p62 = scmp.ne.s32.totalorder %s53, %s54
      %p63 = scmp.eq.s32.totalorder %s22, 0
      %p64 = por %p62, %p63
      %p65 = scmp.ne.s32.totalorder %s53, %s54
      %p66 = scmp.eq.s32.totalorder %s23, 1
      %p67 = por %p65, %p66
      %p69 = scmp.ne.s32.totalorder %s54, %s68
      %p70 = scmp.eq.s32.totalorder %s23, 0
      %p71 = por %p69, %p70
      %s73 = sadd.s32 %s72, 1
      %p76 = scmp.eq.s32.totalorder %s17, 1
      %p77 = scmp.ne.s32.totalorder %s72, %s74
      %p78 = scmp.eq.s32.totalorder %s17, 0
      %p79 = por %p77, %p78
      %p80 = scmp.ne.s32.totalorder %s72, %s74
      %p81 = scmp.eq.s32.totalorder %s22, 1
      %p82 = por %p80, %p81
      %p83 = scmp.ne.s32.totalorder %s74, %s75
      %p84 = scmp.eq.s32.totalorder %s22, 0
      %p85 = por %p83, %p84
      %p86 = scmp.ne.s32.totalorder %s74, %s75
      %p87 = scmp.eq.s32.totalorder %s23, 1
      %p88 = por %p86, %p87
      %p90 = scmp.ne.s32.totalorder %s75, %s89
      %p91 = scmp.eq.s32.totalorder %s23, 0
      %p92 = por %p90, %p91
      %s94 = sadd.s32 %s93, 1
      %p97 = scmp.eq.s32.totalorder %s17, 1
      %p98 = scmp.ne.s32.totalorder %s93, %s95
      %p99 = scmp.eq.s32.totalorder %s17, 0
      %p100 = por %p98, %p99
      %p101 = scmp.ne.s32.totalorder %s93, %s95
      %p102 = scmp.eq.s32.totalorder %s22, 1
      %p103 = por %p101, %p102
      %p104 = scmp.ne.s32.totalorder %s95, %s96
      %p105 = scmp.eq.s32.totalorder %s22, 0
      %p106 = por %p104, %p105
      %p107 = scmp.ne.s32.totalorder %s95, %s96
      %p108 = scmp.eq.s32.totalorder %s23, 1
      %p109 = por %p107, %p108
      %p111 = scmp.ne.s32.totalorder %s96, %s110
      %p112 = scmp.eq.s32.totalorder %s23, 0
      %p113 = por %p111, %p112
      %s114 = ssub.s32 %s17, %s24
      %p115 = scmp.eq.s32.totalorder %s114, 0
      %s117 = sadd.s32 %s116, 1
      %s118 = scalar_select %p115, %s116, %s117
      %p121 = pneg %p115
      %p122 = scmp.eq.s32.totalorder %s17, 1
      %p123 = por %p121, %p122
      %p124 = scmp.ne.s32.totalorder %s116, %s119
      %p125 = scmp.eq.s32.totalorder %s17, 0
      %p126 = por %p124, %p125
      %p127 = scmp.ne.s32.totalorder %s116, %s119
      %p128 = scmp.eq.s32.totalorder %s22, 1
      %p129 = por %p127, %p128
      %p130 = scmp.ne.s32.totalorder %s119, %s120
      %p131 = scmp.eq.s32.totalorder %s22, 0
      %p132 = por %p130, %p131
      %p133 = scmp.ne.s32.totalorder %s119, %s120
      %p134 = scmp.eq.s32.totalorder %s23, 1
      %p135 = por %p133, %p134
      %p137 = scmp.ne.s32.totalorder %s120, %s136
      %p138 = scmp.eq.s32.totalorder %s23, 0
      %p139 = por %p137, %p138
      %p140 = scmp.le.s32.totalorder 1, %s17
      %p141 = scmp.lt.s32.totalorder %s17, 3
      %p142 = pnand %p140, %p141
      %p143 = pneg %p142
      // Predicated region
      $region9: #{tpu_custom_call.1} parent=5 // pred_check
        _
      $region10: #{tpu_custom_call.1} parent=5 // pred_check_branch
        %145 = sbr.rel (%p142) target = $region12
      $region11: #{tpu_custom_call.1} parent=5 // pred_region
        %s146 = ssub.s32 %s17, 1
        // Predicated region
        $region13: #{tpu_custom_call.1} parent=11 // pred_check
          %p147 = pneg %p64
        $region14: #{tpu_custom_call.1} parent=11 // pred_check_branch
          %149 = sbr.rel (%p147) target = $region16
        $region15: #{tpu_custom_call.1} parent=11 // pred_region
          %s151 = ssub.s32 1024, 1024
          %152 = vsyncadd [#allocation6], %s151
          %s153 = sshll.u32 [#allocation5], 4
          %s154 = int_to_ptr.vmem [resolvable:$true] %s153
          %159 = dma.hbm_to_vmem [thread:$0]  %s1, 1024, %s154, [#allocation6], 64, 64, 4
        $region16: #{tpu_custom_call.1} parent=11 // pred_fallthru
          _
        // Predicated region
        $region17: #{tpu_custom_call.1} parent=11 // pred_check
          %p160 = pneg %p85
        $region18: #{tpu_custom_call.1} parent=11 // pred_check_branch
          %162 = sbr.rel (%p160) target = $region20
        $region19: #{tpu_custom_call.1} parent=11 // pred_region
          %s164 = ssub.s32 1024, 1024
          %165 = vsyncadd [#allocation6], %s164
          %s166 = sshll.u32 [#allocation7], 4
          %s167 = int_to_ptr.vmem [resolvable:$true] %s166
          %172 = dma.hbm_to_vmem [thread:$0]  %s2, 1024, %s167, [#allocation6], 64, 64, 4
        $region20: #{tpu_custom_call.1} parent=11 // pred_fallthru
          _
        // Predicated region
        $region21: #{tpu_custom_call.1} parent=11 // pred_check
          %p173 = pneg %p106
        $region22: #{tpu_custom_call.1} parent=11 // pred_check_branch
          %175 = sbr.rel (%p173) target = $region24
        $region23: #{tpu_custom_call.1} parent=11 // pred_region
          _
        $region24: #{tpu_custom_call.1} parent=11 // pred_fallthru
          _
      $region12: #{tpu_custom_call.1} parent=5 // pred_fallthru
        _
      %p176 = scmp.lt.s32.totalorder %s17, 2
      // Predicated region
      $region25: #{tpu_custom_call.1} parent=5 // pred_check
        %p177 = pneg %p176
      $region26: #{tpu_custom_call.1} parent=5 // pred_check_branch
        %179 = sbr.rel (%p177) target = $region28
      $region27: #{tpu_custom_call.1} parent=5 // pred_region
        // Predicated region
        $region29: #{tpu_custom_call.1} parent=27 // pred_check
          %p180 = pneg %p37
        $region30: #{tpu_custom_call.1} parent=27 // pred_check_branch
          %182 = sbr.rel (%p180) target = $region32
        $region31: #{tpu_custom_call.1} parent=27 // pred_region
          %s183 = sand.u32 %s27, 1
          %s184 = scalar_lea.sflag [#allocation3], %s183
          %s185 = sand.u32 %s27, 1
          %s186 = smul.addr %s185, 16
          %s187 = scalar_lea.vmem [#allocation2], %s186
          %s188 = smul.u32 4, %s17
          %s190 = ssub.s32 256, 256
          %191 = vsyncadd %s184, %s190
          %s192 = smul.addr %s188, 64
          %s193 = scalar_lea.hbm %s0, %s192
          %s194 = sshll.u32 %s187, 4
          %s195 = int_to_ptr.vmem [resolvable:$true] %s194
          %200 = dma.hbm_to_vmem [thread:$0]  %s193, 256, %s195, %s184, 64, 64, 4
        $region32: #{tpu_custom_call.1} parent=27 // pred_fallthru
          _
      $region28: #{tpu_custom_call.1} parent=5 // pred_fallthru
        _
      %p201 = scmp.le.s32.totalorder 1, %s17
      %p202 = scmp.lt.s32.totalorder %s17, 3
      %p203 = pnand %p201, %p202
      %p204 = pneg %p203
      // Predicated region
      $region33: #{tpu_custom_call.1} parent=5 // pred_check
        _
      $region34: #{tpu_custom_call.1} parent=5 // pred_check_branch
        %206 = sbr.rel (%p203) target = $region36
      $region35: #{tpu_custom_call.1} parent=5 // pred_region
        %s207 = ssub.s32 %s17, 1
        %s208 = sand.u32 %s30, 1
        %s209 = scalar_lea.sflag [#allocation3], %s208
        %s210 = sand.u32 %s30, 1
        %s211 = smul.addr %s210, 16
        %s212 = scalar_lea.vmem [#allocation2], %s211
        // Predicated region
        $region37: #{tpu_custom_call.1} parent=35 // pred_check
          %p213 = pneg %p43
        $region38: #{tpu_custom_call.1} parent=35 // pred_check_branch
          %215 = sbr.rel (%p213) target = $region40
        $region39: #{tpu_custom_call.1} parent=35 // pred_region
          %216 = dma.done %s209, 256
        $region40: #{tpu_custom_call.1} parent=35 // pred_fallthru
          _
        // Predicated region
        $region41: #{tpu_custom_call.1} parent=35 // pred_check
          %p217 = pneg %p64
        $region42: #{tpu_custom_call.1} parent=35 // pred_check_branch
          %219 = sbr.rel (%p217) target = $region44
        $region43: #{tpu_custom_call.1} parent=35 // pred_region
          %220 = dma.done [#allocation6], 1024
        $region44: #{tpu_custom_call.1} parent=35 // pred_fallthru
          _
        // Predicated region
        $region45: #{tpu_custom_call.1} parent=35 // pred_check
          %p221 = pneg %p85
        $region46: #{tpu_custom_call.1} parent=35 // pred_check_branch
          %223 = sbr.rel (%p221) target = $region48
        $region47: #{tpu_custom_call.1} parent=35 // pred_region
          %224 = dma.done [#allocation6], 1024
        $region48: #{tpu_custom_call.1} parent=35 // pred_fallthru
          _
        %s225 = sand.u32 %s30, 1
        %s226 = scalar_lea.sflag [#allocation3], %s225
        %s227 = sand.u32 %s30, 1
        %s228 = smul.addr %s227, 16
        %s229 = scalar_lea.vmem [#allocation2], %s228
        %p230 = pneg %p43
        %p231 = pneg %p40
        %p232 = pneg %p64
        %p233 = pneg %p61
        %p234 = pneg %p85
        %p235 = pneg %p82
        %p236 = pneg %p106
        %p237 = pneg %p103
        %p238 = pneg %p132
        %p239 = pneg %p129
        %s240 = sand.u32 %s119, 1
        %s241 = scalar_lea.sflag [#allocation4], %s240
        %s242 = sand.u32 %s119, 1
        %s243 = smul.addr %s242, 32
        %s244 = scalar_lea.vmem [#allocation8], %s243
        %s245 = smul.u32 4, %s22
        %s246 = smul.u32 4, %s22
        %v248 = vld [vmem:[%s212] sm:$0xf]
        %v249 = vld [vmem:[%s212 + $0x4] sm:$0xf]
        %v250 = vld [vmem:[%s212 + $0x8] sm:$0xf]
        %v251 = vld [vmem:[%s212 + $0xc] sm:$0xf]
        %v252 = vld [vmem:[#allocation5] sm:$0xf]
        %v253 = vld [vmem:[#allocation5 + $0x4] sm:$0xf]
        %v254 = vld [vmem:[#allocation5 + $0x8] sm:$0xf]
        %v255 = vld [vmem:[#allocation5 + $0xc] sm:$0xf]
        %v256 = vld [vmem:[#allocation5 + $0x10] sm:$0xf]
        %v257 = vld [vmem:[#allocation5 + $0x14] sm:$0xf]
        %v258 = vld [vmem:[#allocation5 + $0x18] sm:$0xf]
        %v259 = vld [vmem:[#allocation5 + $0x1c] sm:$0xf]
        %v260 = vld [vmem:[#allocation5 + $0x20] sm:$0xf]
        %v261 = vld [vmem:[#allocation5 + $0x24] sm:$0xf]
        %v262 = vld [vmem:[#allocation5 + $0x28] sm:$0xf]
        %v263 = vld [vmem:[#allocation5 + $0x2c] sm:$0xf]
        %v264 = vld [vmem:[#allocation5 + $0x30] sm:$0xf]
        %v265 = vld [vmem:[#allocation5 + $0x34] sm:$0xf]
        %v266 = vld [vmem:[#allocation5 + $0x38] sm:$0xf]
        %v267 = vld [vmem:[#allocation5 + $0x3c] sm:$0xf]
        %v268 = vld [vmem:[%s3] sm:$0x1]
        %v269 = vlaneseq
        %v270 = vshrl.u32 %v269, 7
        %v271 = vsub.s32 0, %v270
        %v272 = vrot.slane %v268, %v271
        %v277 = vunpack.c.l.b16 %v248
        %v278 = vunpack.c.l.b16 %v249
        %v279 = vunpack.c.l.b16 %v250
        %v280 = vunpack.c.l.b16 %v251
        %v281 = vpack.c.b16 %v278, %v277
        %v282 = vpack.c.b16 %v280, %v279
        %v301 = vunpack.c.l.b16 %v252
        %v302 = vunpack.c.l.b16 %v253
        %v303 = vunpack.c.l.b16 %v254
        %v304 = vunpack.c.l.b16 %v255
        %v305 = vunpack.c.l.b16 %v256
        %v306 = vunpack.c.l.b16 %v257
        %v307 = vunpack.c.l.b16 %v258
        %v308 = vunpack.c.l.b16 %v259
        %v309 = vunpack.c.l.b16 %v260
        %v310 = vunpack.c.l.b16 %v261
        %v311 = vunpack.c.l.b16 %v262
        %v312 = vunpack.c.l.b16 %v263
        %v313 = vunpack.c.l.b16 %v264
        %v314 = vunpack.c.l.b16 %v265
        %v315 = vunpack.c.l.b16 %v266
        %v316 = vunpack.c.l.b16 %v267
        %v317 = vpack.c.b16 %v302, %v301
        %v318 = vpack.c.b16 %v304, %v303
        %v319 = vpack.c.b16 %v306, %v305
        %v320 = vpack.c.b16 %v308, %v307
        %v321 = vpack.c.b16 %v310, %v309
        %v322 = vpack.c.b16 %v312, %v311
        %v323 = vpack.c.b16 %v314, %v313
        %v324 = vpack.c.b16 %v316, %v315
        %333 = vmatprep.subr.bf16.mxu0 0
        %334 = vmatpush1.bf16.msra.mxu0 %v317
        %335 = vmatprep.subr.bf16.mxu0 0
        %336 = vmatpush1.bf16.msra.mxu0 %v318
        %337 = vmatprep.subr.bf16.mxu0 0
        %338 = vmatpush1.bf16.msra.mxu0 %v319
        %339 = vmatprep.subr.bf16.mxu0 0
        %340 = vmatpush1.bf16.msra.mxu0 %v320
        %341 = vmatprep.subr.bf16.mxu0 0
        %342 = vmatpush1.bf16.msra.mxu0 %v321
        %343 = vmatprep.subr.bf16.mxu0 0
        %344 = vmatpush1.bf16.msra.mxu0 %v322
        %345 = vmatprep.subr.bf16.mxu0 0
        %346 = vmatpush1.bf16.msra.mxu0 %v323
        %347 = vmatprep.subr.bf16.mxu0 0
        %348 = vmatpush1.bf16.msra.mxu0 %v324
        %349 = vmatprep.subr.bf16.mxu0 0
        %350 = vmatpush1.bf16.msra.mxu0 0
        %351 = vmatprep.subr.bf16.mxu0 0
        %352 = vmatpush1.bf16.msra.mxu0 0
        %353 = vmatprep.subr.bf16.mxu0 0
        %354 = vmatpush1.bf16.msra.mxu0 0
        %355 = vmatprep.subr.bf16.mxu0 0
        %356 = vmatpush1.bf16.msra.mxu0 0
        %357 = vmatprep.subr.bf16.mxu0 0
        %358 = vmatpush1.bf16.msra.mxu0 0
        %359 = vmatprep.subr.bf16.mxu0 0
        %360 = vmatpush1.bf16.msra.mxu0 0
        %361 = vmatprep.subr.bf16.mxu0 0
        %362 = vmatpush1.bf16.msra.mxu0 0
        %363 = vmatprep.subr.bf16.mxu0 0
        %364 = vmatpush1.bf16.msra.mxu0 0
        %365 = vmatprep.mubr.bf16.mxu0 0
        %366 = vmatmul.mubr.bf16.gmra.mrb[0].mxu0 %v281
        %v367 = vpop.f32.mrb[0].mxu0
        %v368 = vadd.f32 %v272, %v367
        %v369 = vpop.f32.mrb[0].mxu0
        %v370 = vpop.f32.mrb[0].mxu0
        %v371 = vadd.f32 %v272, %v370
        %v372 = vpop.f32.mrb[0].mxu0
        %373 = vmatprep.mubr.bf16.mxu0 0
        %374 = vmatmul.mubr.bf16.gmra.mrb[0].mxu0 %v282
        %v375 = vpop.f32.mrb[0].mxu0
        %v376 = vadd.f32 %v272, %v375
        %v377 = vpop.f32.mrb[0].mxu0
        %v378 = vpop.f32.mrb[0].mxu0
        %v379 = vadd.f32 %v272, %v378
        %v380 = vpop.f32.mrb[0].mxu0
        %381 = vdwg.mxu0
        %v382 = vmul.f32 %v368, 0.5
        %v383 = vmul.f32 %v371, 0.5
        %v384 = vmul.f32 %v376, 0.5
        %v385 = vmul.f32 %v379, 0.5
        %v386 = vmul.f32 %v368, 0.044715
        %v387 = vmul.f32 %v371, 0.044715
        %v388 = vmul.f32 %v376, 0.044715
        %v389 = vmul.f32 %v379, 0.044715
        %v390 = vmul.f32 %v386, %v368
        %v391 = vmul.f32 %v387, %v371
        %v392 = vmul.f32 %v388, %v376
        %v393 = vmul.f32 %v389, %v379
        %v394 = vmul.f32 %v390, %v368
        %v395 = vmul.f32 %v391, %v371
        %v396 = vmul.f32 %v392, %v376
        %v397 = vmul.f32 %v393, %v379
        %v398 = vadd.f32 %v368, %v394
        %v399 = vadd.f32 %v371, %v395
        %v400 = vadd.f32 %v376, %v396
        %v401 = vadd.f32 %v379, %v397
        %v402 = vmul.f32 %v398, 0.7978846
        %v403 = vmul.f32 %v399, 0.7978846
        %v404 = vmul.f32 %v400, 0.7978846
        %v405 = vmul.f32 %v401, 0.7978846
        %v406 = vtanh.pop %v402
        %v407 = vtanh.pop %v403
        %v408 = vtanh.pop %v404
        %v409 = vtanh.pop %v405
        %v410 = vadd.f32 %v406, 1.0
        %v411 = vadd.f32 %v407, 1.0
        %v412 = vadd.f32 %v408, 1.0
        %v413 = vadd.f32 %v409, 1.0
        %v414 = vmul.f32 %v382, %v410
        %v415 = vmul.f32 %v383, %v411
        %v416 = vmul.f32 %v384, %v412
        %v417 = vmul.f32 %v385, %v413
        %v418 = vpack.c.bf16 %v415, %v414
        %v419 = vpack.c.bf16 %v417, %v416
        %v420 = vld [vmem:[#allocation7] sm:$0xf]
        %v421 = vld [vmem:[#allocation7 + $0x4] sm:$0xf]
        %v422 = vld [vmem:[#allocation7 + $0x8] sm:$0xf]
        %v423 = vld [vmem:[#allocation7 + $0xc] sm:$0xf]
        %v424 = vld [vmem:[#allocation7 + $0x10] sm:$0xf]
        %v425 = vld [vmem:[#allocation7 + $0x14] sm:$0xf]
        %v426 = vld [vmem:[#allocation7 + $0x18] sm:$0xf]
        %v427 = vld [vmem:[#allocation7 + $0x1c] sm:$0xf]
        %v428 = vld [vmem:[#allocation7 + $0x20] sm:$0xf]
        %v429 = vld [vmem:[#allocation7 + $0x24] sm:$0xf]
        %v430 = vld [vmem:[#allocation7 + $0x28] sm:$0xf]
        %v431 = vld [vmem:[#allocation7 + $0x2c] sm:$0xf]
        %v432 = vld [vmem:[#allocation7 + $0x30] sm:$0xf]
        %v433 = vld [vmem:[#allocation7 + $0x34] sm:$0xf]
        %v434 = vld [vmem:[#allocation7 + $0x38] sm:$0xf]
        %v435 = vld [vmem:[#allocation7 + $0x3c] sm:$0xf]
        %v436 = vld [vmem:[%s3 + $0x1] sm:$0x1]
        %v437 = vlaneseq
        %v438 = vshrl.u32 %v437, 7
        %v439 = vsub.s32 0, %v438
        %v440 = vrot.slane %v436, %v439
        %v457 = vunpack.c.l.b16 %v420
        %v458 = vunpack.c.l.b16 %v421
        %v459 = vunpack.c.l.b16 %v422
        %v460 = vunpack.c.l.b16 %v423
        %v461 = vunpack.c.l.b16 %v424
        %v462 = vunpack.c.l.b16 %v425
        %v463 = vunpack.c.l.b16 %v426
        %v464 = vunpack.c.l.b16 %v427
        %v465 = vunpack.c.l.b16 %v428
        %v466 = vunpack.c.l.b16 %v429
        %v467 = vunpack.c.l.b16 %v430
        %v468 = vunpack.c.l.b16 %v431
        %v469 = vunpack.c.l.b16 %v432
        %v470 = vunpack.c.l.b16 %v433
        %v471 = vunpack.c.l.b16 %v434
        %v472 = vunpack.c.l.b16 %v435
        %v473 = vpack.c.b16 %v458, %v457
        %v474 = vpack.c.b16 %v460, %v459
        %v475 = vpack.c.b16 %v462, %v461
        %v476 = vpack.c.b16 %v464, %v463
        %v477 = vpack.c.b16 %v466, %v465
        %v478 = vpack.c.b16 %v468, %v467
        %v479 = vpack.c.b16 %v470, %v469
        %v480 = vpack.c.b16 %v472, %v471
        %489 = vmatprep.subr.bf16.mxu0 0
        %490 = vmatpush1.bf16.msra.mxu0 %v473
        %491 = vmatprep.subr.bf16.mxu0 0
        %492 = vmatpush1.bf16.msra.mxu0 %v474
        %493 = vmatprep.subr.bf16.mxu0 0
        %494 = vmatpush1.bf16.msra.mxu0 %v475
        %495 = vmatprep.subr.bf16.mxu0 0
        %496 = vmatpush1.bf16.msra.mxu0 %v476
        %497 = vmatprep.subr.bf16.mxu0 0
        %498 = vmatpush1.bf16.msra.mxu0 %v477
        %499 = vmatprep.subr.bf16.mxu0 0
        %500 = vmatpush1.bf16.msra.mxu0 %v478
        %501 = vmatprep.subr.bf16.mxu0 0
        %502 = vmatpush1.bf16.msra.mxu0 %v479
        %503 = vmatprep.subr.bf16.mxu0 0
        %504 = vmatpush1.bf16.msra.mxu0 %v480
        %505 = vmatprep.subr.bf16.mxu0 0
        %506 = vmatpush1.bf16.msra.mxu0 0
        %507 = vmatprep.subr.bf16.mxu0 0
        %508 = vmatpush1.bf16.msra.mxu0 0
        %509 = vmatprep.subr.bf16.mxu0 0
        %510 = vmatpush1.bf16.msra.mxu0 0
        %511 = vmatprep.subr.bf16.mxu0 0
        %512 = vmatpush1.bf16.msra.mxu0 0
        %513 = vmatprep.subr.bf16.mxu0 0
        %514 = vmatpush1.bf16.msra.mxu0 0
        %515 = vmatprep.subr.bf16.mxu0 0
        %516 = vmatpush1.bf16.msra.mxu0 0
        %517 = vmatprep.subr.bf16.mxu0 0
        %518 = vmatpush1.bf16.msra.mxu0 0
        %519 = vmatprep.subr.bf16.mxu0 0
        %520 = vmatpush1.bf16.msra.mxu0 0
        %521 = vmatprep.mubr.bf16.mxu0 0
        %522 = vmatmul.mubr.bf16.gmra.mrb[0].mxu0 %v418
        %v523 = vpop.f32.mrb[0].mxu0
        %v524 = vadd.f32 %v440, %v523
        %v525 = vpop.f32.mrb[0].mxu0
        %v526 = vpop.f32.mrb[0].mxu0
        %v527 = vadd.f32 %v440, %v526
        %v528 = vpop.f32.mrb[0].mxu0
        %529 = vmatprep.mubr.bf16.mxu0 0
        %530 = vmatmul.mubr.bf16.gmra.mrb[0].mxu0 %v419
        %v531 = vpop.f32.mrb[0].mxu0
        %v532 = vadd.f32 %v440, %v531
        %v533 = vpop.f32.mrb[0].mxu0
        %v534 = vpop.f32.mrb[0].mxu0
        %v535 = vadd.f32 %v440, %v534
        %v536 = vpop.f32.mrb[0].mxu0
        %537 = vdwg.mxu0
        %v538 = vadd.f32 %v524, %v368
        %v539 = vadd.f32 %v527, %v371
        %v540 = vadd.f32 %v532, %v376
        %v541 = vadd.f32 %v535, %v379
        %542 = vadd.xlane.f32.xlu0 %v538
        %v543 = vpop.xlane.xlu0 %542
        %544 = vadd.xlane.f32.xlu0 %v539
        %v545 = vpop.xlane.xlu0 %544
        %546 = vadd.xlane.f32.xlu0 %v540
        %v547 = vpop.xlane.xlu0 %546
        %548 = vadd.xlane.f32.xlu0 %v541
        %v549 = vpop.xlane.xlu0 %548
        %v550 = vmul.f32 %v538, %v538
        %v551 = vmul.f32 %v539, %v539
        %v552 = vmul.f32 %v540, %v540
        %v553 = vmul.f32 %v541, %v541
        %554 = vadd.xlane.f32.xlu0 %v550
        %v555 = vpop.xlane.xlu0 %554
        %556 = vadd.xlane.f32.xlu0 %v551
        %v557 = vpop.xlane.xlu0 %556
        %558 = vadd.xlane.f32.xlu0 %v552
        %v559 = vpop.xlane.xlu0 %558
        %560 = vadd.xlane.f32.xlu0 %v553
        %v561 = vpop.xlane.xlu0 %560
        %v562 = vmul.f32 %v543, 0.0078125
        %v563 = vmul.f32 %v545, 0.0078125
        %v564 = vmul.f32 %v547, 0.0078125
        %v565 = vmul.f32 %v549, 0.0078125
        %v566 = vmul.f32 %v555, 0.0078125
        %v567 = vmul.f32 %v557, 0.0078125
        %v568 = vmul.f32 %v559, 0.0078125
        %v569 = vmul.f32 %v561, 0.0078125
        %v570 = vmul.f32 %v562, %v562
        %v571 = vmul.f32 %v563, %v563
        %v572 = vmul.f32 %v564, %v564
        %v573 = vmul.f32 %v565, %v565
        %v574 = vsub.f32 %v566, %v570
        %v575 = vsub.f32 %v567, %v571
        %v576 = vsub.f32 %v568, %v572
        %v577 = vsub.f32 %v569, %v573
        %v578 = vmax.f32 %v574, 0.0
        %v579 = vmax.f32 %v575, 0.0
        %v580 = vmax.f32 %v576, 0.0
        %v581 = vmax.f32 %v577, 0.0
        %v582 = vadd.f32 %v578, 1e-05
        %v583 = vadd.f32 %v579, 1e-05
        %v584 = vadd.f32 %v580, 1e-05
        %v585 = vadd.f32 %v581, 1e-05
        %v586 = vrsqrt.pop %v582
        %v587 = vrsqrt.pop %v583
        %v588 = vrsqrt.pop %v584
        %v589 = vrsqrt.pop %v585
        %v590 = vsub.f32 %v538, %v562
        %v591 = vsub.f32 %v539, %v563
        %v592 = vsub.f32 %v540, %v564
        %v593 = vsub.f32 %v541, %v565
        %v594 = vmul.f32 %v590, %v586
        %v595 = vmul.f32 %v591, %v587
        %v596 = vmul.f32 %v592, %v588
        %v597 = vmul.f32 %v593, %v589
        %v598 = vld [vmem:[%s3 + $0x2] sm:$0x1]
        %v599 = vlaneseq
        %v600 = vshrl.u32 %v599, 7
        %v601 = vsub.s32 0, %v600
        %v602 = vrot.slane %v598, %v601
        %v603 = vmul.f32 %v594, %v602
        %v604 = vmul.f32 %v595, %v602
        %v605 = vmul.f32 %v596, %v602
        %v606 = vmul.f32 %v597, %v602
        %v607 = vld [vmem:[%s3 + $0x3] sm:$0x1]
        %v608 = vlaneseq
        %v609 = vshrl.u32 %v608, 7
        %v610 = vsub.s32 0, %v609
        %v611 = vrot.slane %v607, %v610
        %v612 = vadd.f32 %v603, %v611
        %v613 = vadd.f32 %v604, %v611
        %v614 = vadd.f32 %v605, %v611
        %v615 = vadd.f32 %v606, %v611
        %616 = vst [vmem:[%s244] sm:$0xff] %v612
        %617 = vst [vmem:[%s244 + $0x8] sm:$0xff] %v613
        %618 = vst [vmem:[%s244 + $0x10] sm:$0xff] %v614
        %619 = vst [vmem:[%s244 + $0x18] sm:$0xff] %v615
        %s620 = sand.u32 %s119, 1
        %s621 = scalar_lea.sflag [#allocation4], %s620
        %s622 = sand.u32 %s119, 1
        %s623 = smul.addr %s622, 32
        %s624 = scalar_lea.vmem [#allocation8], %s623
        // Predicated region
        $region49: #{tpu_custom_call.1} parent=35 // pred_check
          %p625 = pneg %p129
        $region50: #{tpu_custom_call.1} parent=35 // pred_check_branch
          %627 = sbr.rel (%p625) target = $region52
        $region51: #{tpu_custom_call.1} parent=35 // pred_region
          %s628 = smul.u32 4, %s22
          %s630 = ssub.s32 512, 512
          %631 = vsyncadd %s621, %s630
          %s632 = smul.addr %s628, 128
          %s633 = scalar_lea.hbm %s4, %s632
          %s634 = sshll.u32 %s624, 4
          %s635 = int_to_ptr.vmem [resolvable:$true] %s634
          %640 = dma.vmem_to_hbm [thread:$0]  %s635, 512, %s633, %s621, 128, 128, 8
        $region52: #{tpu_custom_call.1} parent=35 // pred_fallthru
          _
      $region36: #{tpu_custom_call.1} parent=5 // pred_fallthru
        _
      %p641 = scmp.le.s32.totalorder 2, %s17
      // Predicated region
      $region53: #{tpu_custom_call.1} parent=5 // pred_check
        %p642 = pneg %p641
      $region54: #{tpu_custom_call.1} parent=5 // pred_check_branch
        %644 = sbr.rel (%p642) target = $region56
      $region55: #{tpu_custom_call.1} parent=5 // pred_region
        %s645 = ssub.s32 %s17, 2
        // Predicated region
        $region57: #{tpu_custom_call.1} parent=55 // pred_check
          %p646 = pneg %p135
        $region58: #{tpu_custom_call.1} parent=55 // pred_check_branch
          %648 = sbr.rel (%p646) target = $region60
        $region59: #{tpu_custom_call.1} parent=55 // pred_region
          %s649 = sand.u32 %s120, 1
          %s650 = scalar_lea.sflag [#allocation4], %s649
          %s651 = sand.u32 %s120, 1
          %s652 = smul.addr %s651, 32
          %s653 = scalar_lea.vmem [#allocation8], %s652
          %654 = dma.done %s650, 512
        $region60: #{tpu_custom_call.1} parent=55 // pred_fallthru
          _
      $region56: #{tpu_custom_call.1} parent=5 // pred_fallthru
        _
    $region6: #{tpu_custom_call.1} parent=1 // loop_footer
      %s21 = sadd.s32 1, %s17
    $region7: #{tpu_custom_call.1} parent=1 // loop_footer_branch
      %16 = sbr.rel target = $region3
    $region8: #{tpu_custom_call.1} parent=1 // loop_exit
      _
    %655 = vsyncpa [#allocation3], 1
    %s656 = scalar_lea.sflag [#allocation3], 1
    %657 = vsyncpa %s656, 1
    %658 = vsyncpa [#allocation6], 1
    %659 = vsyncpa [#allocation4], 1
    %s660 = scalar_lea.sflag [#allocation4], 1
    %661 = vsyncpa %s660, 1

</llo_original>
